<compile_context>
chip_gen: v6e
topology: v6e:2x2x1
jax: 0.10.0
libtpu: 0.0.40
codegen_flags: <defaults>
</compile_context>

<pallas_src>
from math import sqrt

import jax
import jax.numpy as jnp
from jax.experimental import pallas as pl
from jax.experimental.pallas import tpu as pltpu


def _round_up(x, m):
    return ((x + m - 1) // m) * m


def _pick_tile(n, candidates, align):
    """Pad n up to `align`, then pick the largest candidate tile dividing it."""
    n_pad = _round_up(n, align)
    for c in candidates:
        if c <= n_pad and n_pad % c == 0:
            return n_pad, c
    return n_pad, n_pad  # single full-extent tile


def _gcn_kernel(adj_ref, xp_ref, w_ref, b_ref, o_ref, acc_ref):
    # adj_ref: (TM, TK)            row/col tile of adjacency
    # xp_ref : (TK, KIN)           batch-packed features, rows = adj columns
    # w_ref  : (KIN, OUT_P)        block-diag weights, lane-padded
    # b_ref  : (1, OUT_P)          batch-tiled bias, lane-padded
    # o_ref  : (TM, OUT_P)         lane-dense output tile
    # acc_ref: (TM, KIN) f32       accumulator for adj @ Xp over the K axis
    k = pl.program_id(1)

    @pl.when(k == 0)
    def _():
        acc_ref[...] = jnp.zeros_like(acc_ref)

    # Accumulate (adj @ Xp) over column tiles of adj.
    acc_ref[...] += jnp.dot(
        adj_ref[...], xp_ref[...], preferred_element_type=jnp.float32
    )

    @pl.when(k == pl.num_programs(1) - 1)
    def _():
        # (adj @ Xp) @ Wbd + bias, then relu — all batches at once (lane-packed).
        out = jnp.dot(acc_ref[...], w_ref[...], preferred_element_type=jnp.float32)
        out = out + b_ref[...]
        o_ref[...] = jnp.maximum(out, 0.0).astype(o_ref.dtype)


def gcn_forward(adj, x, weights, biases, *, compute_dtype=jnp.float32):
    B, N, D_in = x.shape
    D_out = weights.shape[1]

    kin = B * D_in                      # packed contraction dim for W matmul
    kout = B * D_out                    # packed output feature dim
    out_p = _round_up(kout, 128)        # lane-dense output width

    # Row tile (output rows) and column tile (K reduction) of adj.
    n_rows, tm = _pick_tile(N, (256, 128), 8 if N < 128 else 128)
    n_cols, tk = _pick_tile(N, (512, 256, 128), 128)
    grid = (n_rows // tm, n_cols // tk)

    # ---- wrapper-side packing (layout plumbing only) -----------------------
    # Xp[m, b*D_in + j] = X[b, m, j]
    xp = jnp.transpose(x, (1, 0, 2)).reshape(N, kin)
    # Block-diagonal weights keep the second matmul batch-packed in the lanes.
    w_bd = jnp.kron(jnp.eye(B, dtype=weights.dtype), weights)      # (kin, kout)
    bias_p = jnp.tile(biases, B)                                   # (kout,)

    # Zero-pad to tile-aligned shapes (padding sliced off at the end).
    adj_p = (
        jnp.zeros((n_rows, n_cols), compute_dtype)
        .at[:N, :N].set(adj.astype(compute_dtype))
    )
    xp_p = (
        jnp.zeros((n_cols, kin), compute_dtype)
        .at[:N, :].set(xp.astype(compute_dtype))
    )
    w_p = (
        jnp.zeros((kin, out_p), jnp.float32)
        .at[:, :kout].set(w_bd.astype(jnp.float32))
    )
    bias_2d = (
        jnp.zeros((1, out_p), jnp.float32)
        .at[0, :kout].set(bias_p.astype(jnp.float32))
    )

    flops = 2.0 * N * N * kin + 2.0 * N * kin * kout
    bytes_accessed = (
        adj_p.size * adj_p.dtype.itemsize
        + xp_p.size * xp_p.dtype.itemsize
        + w_p.size * 4 + bias_2d.size * 4
        + n_rows * out_p * 4
    )

    out_padded = pl.pallas_call(
        _gcn_kernel,
        out_shape=jax.ShapeDtypeStruct((n_rows, out_p), jnp.float32),
        grid_spec=pltpu.PrefetchScalarGridSpec(
            num_scalar_prefetch=0,
            grid=grid,
            in_specs=[
                pl.BlockSpec((tm, tk), lambda i, k: (i, k)),      # adj tile
                pl.BlockSpec((tk, kin), lambda i, k: (k, 0)),     # packed X
                pl.BlockSpec((kin, out_p), lambda i, k: (0, 0)),  # block-diag W
                pl.BlockSpec((1, out_p), lambda i, k: (0, 0)),    # packed bias
            ],
            out_specs=pl.BlockSpec((tm, out_p), lambda i, k: (i, 0)),
            scratch_shapes=[pltpu.VMEM((tm, kin), jnp.float32)],
        ),
        compiler_params=pltpu.CompilerParams(
            dimension_semantics=("parallel", "arbitrary"),
        ),
        cost_estimate=pl.CostEstimate(
            flops=int(flops),
            transcendentals=0,
            bytes_accessed=int(bytes_accessed),
        ),
    )(adj_p, xp_p, w_p, bias_2d)

    # Unpack: out_padded[n, b*D_out + o] -> (B, N, D_out)
    out = out_padded[:N, :kout].reshape(N, B, D_out)
    return jnp.transpose(out, (1, 0, 2))


def gcn_reference(adj, x, weights, biases):
    ax = jnp.einsum("nm,bmd->bnd", adj, x)
    out = jnp.einsum("bnd,do->bno", ax, weights) + biases
    return jnp.maximum(out, 0.0)


if __name__ == "__main__":
    # Small shapes consistent with the module's forward.
    batch = 2
    num_nodes = 16
    input_dim = 8
    output_dim = 32
    bias_init = 0.1

    key = jax.random.PRNGKey(0)
    k_adj, k_x, k_w = jax.random.split(key, 3)

    # Synthetic symmetric "normalized adjacency"-like matrix.
    a = jax.random.uniform(k_adj, (num_nodes, num_nodes), jnp.float32)
    adj = (a + a.T) * 0.5 / num_nodes

    x = jax.random.normal(k_x, (batch, num_nodes, input_dim), jnp.float32)

    # Deterministic xavier_uniform_ equivalent for weights; constant bias.
    bound = sqrt(6.0 / (input_dim + output_dim))
    weights = jax.random.uniform(
        k_w, (input_dim, output_dim), jnp.float32, minval=-bound, maxval=bound
    )
    biases = jnp.full((output_dim,), bias_init, jnp.float32)

    out = gcn_forward(adj, x, weights, biases)
    out = jax.block_until_ready(out)

    ref = gcn_reference(adj, x, weights, biases)
    assert out.shape == (batch, num_nodes, output_dim)
    assert jnp.allclose(out, ref, atol=1e-5, rtol=1e-5)

    print("KERNEL_OK")
</pallas_src>

<mosaic_0001>
module attributes {stable_mosaic.version = 11 : i64} {
  func.func @_gcn_kernel(%arg0: i32, %arg1: i32, %arg2: memref<16x128xf32, #tpu.memory_space<vmem>>, %arg3: memref<128x16xf32, #tpu.memory_space<vmem>>, %arg4: memref<16x128xf32, #tpu.memory_space<vmem>>, %arg5: memref<1x128xf32, #tpu.memory_space<vmem>>, %arg6: memref<16x128xf32, #tpu.memory_space<vmem>>, %arg7: memref<16x16xf32, #tpu.memory_space<vmem>>) attributes {dimension_semantics = [#tpu.dimension_semantics<parallel>, #tpu.dimension_semantics<arbitrary>], iteration_bounds = array<i64: 1, 1>, scalar_prefetch = 0 : i64, scratch_operands = 1 : i64, tpu.core_type = #tpu.core_type<tc>, window_params = [{transform_indices = @transform_0, window_bounds = array<i64: 16, 128>}, {transform_indices = @transform_1, window_bounds = array<i64: 128, 16>}, {pipeline_mode = #tpu.pipeline_mode<synchronous>, transform_indices = @transform_2, window_bounds = array<i64: 16, 128>}, {pipeline_mode = #tpu.pipeline_mode<synchronous>, transform_indices = @transform_3, window_bounds = array<i64: 1, 128>}, {transform_indices = @transform_4, window_bounds = array<i64: 16, 128>}]} {
    %c0_i32 = arith.constant 0 : i32
    %0 = arith.cmpi eq, %arg1, %c0_i32 : i32
    %1 = arith.extui %0 : i1 to i32
    %c0_i32_0 = arith.constant 0 : i32
    %2 = arith.cmpi ne, %1, %c0_i32_0 : i32
    scf.if %2 {
      %cst_10 = arith.constant 0.000000e+00 : f32
      %12 = vector.broadcast %cst_10 : f32 to vector<16x16xf32>
      %c0_11 = arith.constant 0 : index
      %c0_12 = arith.constant 0 : index
      %13 = vector.load %arg7[%c0_11, %c0_12] : memref<16x16xf32, #tpu.memory_space<vmem>>, vector<16x16xf32>
      tpu.vector_store %arg7[%c0_11, %c0_12], %12 {strides = array<i32>} : memref<16x16xf32, #tpu.memory_space<vmem>>, vector<16x16xf32>,
    } else {
    }
    %c0 = arith.constant 0 : index
    %c0_1 = arith.constant 0 : index
    %3 = vector.load %arg7[%c0, %c0_1] : memref<16x16xf32, #tpu.memory_space<vmem>>, vector<16x16xf32>
    %c0_2 = arith.constant 0 : index
    %c0_3 = arith.constant 0 : index
    %4 = vector.load %arg2[%c0_2, %c0_3] : memref<16x128xf32, #tpu.memory_space<vmem>>, vector<16x128xf32>
    %c0_4 = arith.constant 0 : index
    %c0_5 = arith.constant 0 : index
    %5 = vector.load %arg3[%c0_4, %c0_5] : memref<128x16xf32, #tpu.memory_space<vmem>>, vector<128x16xf32>
    %cst = arith.constant dense<0.000000e+00> : vector<16x16xf32>
    %6 = tpu.matmul %4, %5, %cst {dimension_numbers = #tpu.dot_dimension_numbers<[1], [0], [0], [1], [0, 0, 1, 1], [], []>} : vector<16x128xf32>, vector<128x16xf32>, vector<16x16xf32> -> vector<16x16xf32>
    %7 = arith.addf %3, %6 : vector<16x16xf32>
    %c0_6 = arith.constant 0 : index
    %c0_7 = arith.constant 0 : index
    %8 = vector.load %arg7[%c0_6, %c0_7] : memref<16x16xf32, #tpu.memory_space<vmem>>, vector<16x16xf32>
    tpu.vector_store %arg7[%c0_6, %c0_7], %7 {strides = array<i32>} : memref<16x16xf32, #tpu.memory_space<vmem>>, vector<16x16xf32>,
    %c0_i32_8 = arith.constant 0 : i32
    %9 = arith.cmpi eq, %arg1, %c0_i32_8 : i32
    %10 = arith.extui %9 : i1 to i32
    %c0_i32_9 = arith.constant 0 : i32
    %11 = arith.cmpi ne, %10, %c0_i32_9 : i32
    scf.if %11 {
      %c0_10 = arith.constant 0 : index
      %c0_11 = arith.constant 0 : index
      %12 = vector.load %arg7[%c0_10, %c0_11] : memref<16x16xf32, #tpu.memory_space<vmem>>, vector<16x16xf32>
      %c0_12 = arith.constant 0 : index
      %c0_13 = arith.constant 0 : index
      %13 = vector.load %arg4[%c0_12, %c0_13] : memref<16x128xf32, #tpu.memory_space<vmem>>, vector<16x128xf32>
      %cst_14 = arith.constant dense<0.000000e+00> : vector<16x128xf32>
      %14 = tpu.matmul %12, %13, %cst_14 {dimension_numbers = #tpu.dot_dimension_numbers<[1], [0], [0], [1], [0, 0, 1, 1], [], []>} : vector<16x16xf32>, vector<16x128xf32>, vector<16x128xf32> -> vector<16x128xf32>
      %c0_15 = arith.constant 0 : index
      %c0_16 = arith.constant 0 : index
      %15 = vector.load %arg5[%c0_15, %c0_16] : memref<1x128xf32, #tpu.memory_space<vmem>>, vector<1x128xf32>
      %16 = vector.broadcast %15 : vector<1x128xf32> to vector<16x128xf32>
      %17 = arith.addf %14, %16 : vector<16x128xf32>
      %cst_17 = arith.constant 0.000000e+00 : f32
      %18 = vector.broadcast %cst_17 : f32 to vector<16x128xf32>
      %19 = arith.maximumf %17, %18 : vector<16x128xf32>
      %c0_18 = arith.constant 0 : index
      %c0_19 = arith.constant 0 : index
      %20 = vector.load %arg6[%c0_18, %c0_19] : memref<16x128xf32, #tpu.memory_space<vmem>>, vector<16x128xf32>
      tpu.vector_store %arg6[%c0_18, %c0_19], %19 {strides = array<i32>} : memref<16x128xf32, #tpu.memory_space<vmem>>, vector<16x128xf32>,
    } else {
    }
    return
  }
  func.func @transform_0(%arg0: i32, %arg1: i32) -> (i32, i32) {
    %c0_i32 = arith.constant 0 : i32
    return %arg0, %arg1 : i32, i32
  }
  func.func @transform_1(%arg0: i32, %arg1: i32) -> (i32, i32) {
    %c0_i32 = arith.constant 0 : i32
    %c0_i32_0 = arith.constant 0 : i32
    return %arg1, %c0_i32 : i32, i32
  }
  func.func @transform_2(%arg0: i32, %arg1: i32) -> (i32, i32) {
    %c0_i32 = arith.constant 0 : i32
    %c0_i32_0 = arith.constant 0 : i32
    %c0_i32_1 = arith.constant 0 : i32
    return %c0_i32, %c0_i32_0 : i32, i32
  }
  func.func @transform_3(%arg0: i32, %arg1: i32) -> (i32, i32) {
    %c0_i32 = arith.constant 0 : i32
    %c0_i32_0 = arith.constant 0 : i32
    %c0_i32_1 = arith.constant 0 : i32
    return %c0_i32, %c0_i32_0 : i32, i32
  }
  func.func @transform_4(%arg0: i32, %arg1: i32) -> (i32, i32) {
    %c0_i32 = arith.constant 0 : i32
    %c0_i32_0 = arith.constant 0 : i32
    return %arg0, %c0_i32 : i32, i32
  }
}

</mosaic_0001>

<llo_original>
// kernel: tpu_custom_call.1
$region0: #{tpu_custom_call.1}
  #allocation0 [shape = 'u32[]', space=smem, size = 0x4, offset = 0x4, fixed_abs, tag = 'smem constant byte address 0x4 - core index']
  #allocation1 [shape = 'u32[144,128]{1,0:T(1,128)}', space=vmem, size = 0x12000, scoped, tag = 'internal scratch']
  #allocation2 [shape = 'f32[16,16]{1,0:T(8,128)}', space=vmem, size = 0x2000, scoped, tag = 'scratch operand']
  %s0 = inlined_call_operand.vmem [shape: f32[16,128], index: 0, kind: input, shape index: {}]
  %s1 = inlined_call_operand.vmem [shape: f32[128,16], index: 1, kind: input, shape index: {}]
  %s2 = inlined_call_operand.vmem [shape: f32[16,128], index: 2, kind: input, shape index: {}]
  %s3 = inlined_call_operand.vmem [shape: f32[1,128], index: 3, kind: input, shape index: {}]
  %s4 = inlined_call_operand.hbm [shape: f32[16,128], index: 4, kind: output, shape index: {}]
  %s5 = sld [smem:[#allocation0]]
  $region34: #{tpu_custom_call.1} parent=0
    _
  %s7 = ssub.s32 1, %s5
  %s8 = scalar_select 0, %s7, %s5
  $region1: #{tpu_custom_call.1} parent=0
    #allocation3 [shape = 'u8[8192]{0}', space=vmem, size = 0x2000, scoped, tag = 'output window, operand 0, single buffered']
    #allocation4 [shape = 's32[1]{0}', space=sflag, size = 0x4, scoped, tag = 'scoped memory for tpu_custom_call.1']
    %9 = vsyncpa [#allocation4], 0
    // Predicated region
    $region2: #{tpu_custom_call.1} parent=1 // pred_check
      _
    $region3: #{tpu_custom_call.1} parent=1 // pred_check_branch
      %11 = sbr.rel (0) target = $region5
    $region4: #{tpu_custom_call.1} parent=1 // pred_region
      _
    $region5: #{tpu_custom_call.1} parent=1 // pred_fallthru
      _
    // Predicated region
    $region6: #{tpu_custom_call.1} parent=1 // pred_check
      _
    $region7: #{tpu_custom_call.1} parent=1 // pred_check_branch
      %13 = sbr.rel (0) target = $region9
    $region8: #{tpu_custom_call.1} parent=1 // pred_region
      _
    $region9: #{tpu_custom_call.1} parent=1 // pred_fallthru
      _
    // Predicated region
    $region10: #{tpu_custom_call.1} parent=1 // pred_check
      _
    $region11: #{tpu_custom_call.1} parent=1 // pred_check_branch
      %15 = sbr.rel (0) target = $region13
    $region12: #{tpu_custom_call.1} parent=1 // pred_region
      _
    $region13: #{tpu_custom_call.1} parent=1 // pred_fallthru
      _
    // Predicated region
    $region14: #{tpu_custom_call.1} parent=1 // pred_check
      _
    $region15: #{tpu_custom_call.1} parent=1 // pred_check_branch
      %17 = sbr.rel (0) target = $region17
    $region16: #{tpu_custom_call.1} parent=1 // pred_region
      _
    $region17: #{tpu_custom_call.1} parent=1 // pred_fallthru
      _
    %p18 = scmp.eq.s32.totalorder 0, 0
    // Predicated region
    $region18: #{tpu_custom_call.1} parent=1 // pred_check
      %p19 = pneg %p18
    $region19: #{tpu_custom_call.1} parent=1 // pred_check_branch
      %21 = sbr.rel (%p19) target = $region21
    $region20: #{tpu_custom_call.1} parent=1 // pred_region
      %vm22 = vcmask 130048
      %23 = vst.msk [vmem:[#allocation2] sm:$0xff] %vm22, 0.0
      %24 = vst.msk [vmem:[#allocation2 + $0x8] sm:$0xff] %vm22, 0.0
    $region21: #{tpu_custom_call.1} parent=1 // pred_fallthru
      _
    %v25 = vld [vmem:[#allocation2] sm:$0xff]
    %v26 = vld [vmem:[#allocation2 + $0x8] sm:$0xff]
    %v27 = vld [vmem:[%s0] sm:$0xff]
    %v28 = vld [vmem:[%s0 + $0x8] sm:$0xff]
    %v29 = vld [vmem:[%s1] sm:$0xff]
    %v30 = vld [vmem:[%s1 + $0x8] sm:$0xff]
    %v31 = vld [vmem:[%s1 + $0x10] sm:$0xff]
    %v32 = vld [vmem:[%s1 + $0x18] sm:$0xff]
    %v33 = vld [vmem:[%s1 + $0x20] sm:$0xff]
    %v34 = vld [vmem:[%s1 + $0x28] sm:$0xff]
    %v35 = vld [vmem:[%s1 + $0x30] sm:$0xff]
    %v36 = vld [vmem:[%s1 + $0x38] sm:$0xff]
    %v37 = vld [vmem:[%s1 + $0x40] sm:$0xff]
    %v38 = vld [vmem:[%s1 + $0x48] sm:$0xff]
    %v39 = vld [vmem:[%s1 + $0x50] sm:$0xff]
    %v40 = vld [vmem:[%s1 + $0x58] sm:$0xff]
    %v41 = vld [vmem:[%s1 + $0x60] sm:$0xff]
    %v42 = vld [vmem:[%s1 + $0x68] sm:$0xff]
    %v43 = vld [vmem:[%s1 + $0x70] sm:$0xff]
    %v44 = vld [vmem:[%s1 + $0x78] sm:$0xff]
    %45 = vmatprep.subr.mxu0 0.0
    %46 = vmatpush1.msra.mxu0 %v44
    %47 = vmatprep.subr.mxu0 0.0
    %48 = vmatpush1.msra.mxu0 %v43
    %49 = vmatprep.subr.mxu0 0.0
    %50 = vmatpush1.msra.mxu0 %v42
    %51 = vmatprep.subr.mxu0 0.0
    %52 = vmatpush1.msra.mxu0 %v41
    %53 = vmatprep.subr.mxu0 0.0
    %54 = vmatpush1.msra.mxu0 %v40
    %55 = vmatprep.subr.mxu0 0.0
    %56 = vmatpush1.msra.mxu0 %v39
    %57 = vmatprep.subr.mxu0 0.0
    %58 = vmatpush1.msra.mxu0 %v38
    %59 = vmatprep.subr.mxu0 0.0
    %60 = vmatpush1.msra.mxu0 %v37
    %61 = vmatprep.subr.mxu0 0.0
    %62 = vmatpush1.msra.mxu0 %v36
    %63 = vmatprep.subr.mxu0 0.0
    %64 = vmatpush1.msra.mxu0 %v35
    %65 = vmatprep.subr.mxu0 0.0
    %66 = vmatpush1.msra.mxu0 %v34
    %67 = vmatprep.subr.mxu0 0.0
    %68 = vmatpush1.msra.mxu0 %v33
    %69 = vmatprep.subr.mxu0 0.0
    %70 = vmatpush1.msra.mxu0 %v32
    %71 = vmatprep.subr.mxu0 0.0
    %72 = vmatpush1.msra.mxu0 %v31
    %73 = vmatprep.subr.mxu0 0.0
    %74 = vmatpush1.msra.mxu0 %v30
    %75 = vmatprep.subr.mxu0 0.0
    %76 = vmatpush1.msra.mxu0 %v29
    %77 = vmatprep.subr.mxu0 0.0
    %78 = vmatpush2.msra.mxu0 0.0
    %79 = vmatprep.subr.mxu0 0.0
    %80 = vmatpush2.msra.mxu0 0.0
    %81 = vmatprep.subr.mxu0 0.0
    %82 = vmatpush2.msra.mxu0 0.0
    %83 = vmatprep.subr.mxu0 0.0
    %84 = vmatpush2.msra.mxu0 0.0
    %85 = vmatprep.subr.mxu0 0.0
    %86 = vmatpush2.msra.mxu0 0.0
    %87 = vmatprep.subr.mxu0 0.0
    %88 = vmatpush2.msra.mxu0 0.0
    %89 = vmatprep.subr.mxu0 0.0
    %90 = vmatpush2.msra.mxu0 0.0
    %91 = vmatprep.subr.mxu0 0.0
    %92 = vmatpush2.msra.mxu0 0.0
    %93 = vmatprep.subr.mxu0 0.0
    %94 = vmatpush2.msra.mxu0 0.0
    %95 = vmatprep.subr.mxu0 0.0
    %96 = vmatpush2.msra.mxu0 0.0
    %97 = vmatprep.subr.mxu0 0.0
    %98 = vmatpush2.msra.mxu0 0.0
    %99 = vmatprep.subr.mxu0 0.0
    %100 = vmatpush2.msra.mxu0 0.0
    %101 = vmatprep.subr.mxu0 0.0
    %102 = vmatpush2.msra.mxu0 0.0
    %103 = vmatprep.subr.mxu0 0.0
    %104 = vmatpush2.msra.mxu0 0.0
    %105 = vmatprep.subr.mxu0 0.0
    %106 = vmatpush2.msra.mxu0 0.0
    %107 = vmatprep.subr.mxu0 0.0
    %108 = vmatpush2.msra.mxu0 0.0
    %109 = vmatprep.mubr.f32.mxu0 0.0
    %110 = vmatmul.mubr.f32.gmra.mxu0 %v27
    %v111 = vpop.f32.mrf.mxu0
    %v112 = vadd.f32 0.0, %v111
    %v113 = vpop.f32.mrf.mxu0
    %114 = vmatprep.mubr.f32.mxu0 0.0
    %115 = vmatmul.mubr.f32.gmra.mxu0 %v28
    %v116 = vpop.f32.mrf.mxu0
    %v117 = vadd.f32 0.0, %v116
    %v118 = vpop.f32.mrf.mxu0
    %119 = vdwg.mxu0
    %v120 = vadd.f32 %v25, %v112
    %v121 = vadd.f32 %v26, %v117
    %vm122 = vcmask 130048
    %123 = vst.msk [vmem:[#allocation2] sm:$0xff] %vm122, %v120
    %124 = vst.msk [vmem:[#allocation2 + $0x8] sm:$0xff] %vm122, %v121
    // Predicated region
    $region22: #{tpu_custom_call.1} parent=1 // pred_check
      %p125 = pneg %p18
    $region23: #{tpu_custom_call.1} parent=1 // pred_check_branch
      %127 = sbr.rel (%p125) target = $region25
    $region24: #{tpu_custom_call.1} parent=1 // pred_region
      %v128 = vld [vmem:[#allocation2] sm:$0xff]
      %v129 = vld [vmem:[#allocation2 + $0x8] sm:$0xff]
      %v130 = vld [vmem:[%s2] sm:$0xff]
      %v131 = vld [vmem:[%s2 + $0x8] sm:$0xff]
      %v132 = vld [vmem:[%s3] sm:$0x1]
      %v134 = vlaneseq
      %v135 = vshrl.u32 %v134, 7
      %v136 = vsub.s32 0, %v135
      %v137 = vrot.slane %v132, %v136
      %v140 = vsel %vm122, %v128, 0
      %v143 = vsel %vm122, %v129, 0
      %145 = vmatprep.subr.mxu0 0.0
      %146 = vmatpush1.msra.mxu0 0.0
      %147 = vmatprep.subr.mxu0 0.0
      %148 = vmatpush1.msra.mxu0 0.0
      %149 = vmatprep.subr.mxu0 0.0
      %150 = vmatpush1.msra.mxu0 0.0
      %151 = vmatprep.subr.mxu0 0.0
      %152 = vmatpush1.msra.mxu0 0.0
      %153 = vmatprep.subr.mxu0 0.0
      %154 = vmatpush1.msra.mxu0 0.0
      %155 = vmatprep.subr.mxu0 0.0
      %156 = vmatpush1.msra.mxu0 0.0
      %157 = vmatprep.subr.mxu0 0.0
      %158 = vmatpush1.msra.mxu0 0.0
      %159 = vmatprep.subr.mxu0 0.0
      %160 = vmatpush1.msra.mxu0 0.0
      %161 = vmatprep.subr.mxu0 0.0
      %162 = vmatpush1.msra.mxu0 0.0
      %163 = vmatprep.subr.mxu0 0.0
      %164 = vmatpush1.msra.mxu0 0.0
      %165 = vmatprep.subr.mxu0 0.0
      %166 = vmatpush1.msra.mxu0 0.0
      %167 = vmatprep.subr.mxu0 0.0
      %168 = vmatpush1.msra.mxu0 0.0
      %169 = vmatprep.subr.mxu0 0.0
      %170 = vmatpush1.msra.mxu0 0.0
      %171 = vmatprep.subr.mxu0 0.0
      %172 = vmatpush1.msra.mxu0 0.0
      %173 = vmatprep.subr.mxu0 0.0
      %174 = vmatpush1.msra.mxu0 %v131
      %175 = vmatprep.subr.mxu0 0.0
      %176 = vmatpush1.msra.mxu0 %v130
      %177 = vmatprep.subr.mxu0 0.0
      %178 = vmatpush2.msra.mxu0 0.0
      %179 = vmatprep.subr.mxu0 0.0
      %180 = vmatpush2.msra.mxu0 0.0
      %181 = vmatprep.subr.mxu0 0.0
      %182 = vmatpush2.msra.mxu0 0.0
      %183 = vmatprep.subr.mxu0 0.0
      %184 = vmatpush2.msra.mxu0 0.0
      %185 = vmatprep.subr.mxu0 0.0
      %186 = vmatpush2.msra.mxu0 0.0
      %187 = vmatprep.subr.mxu0 0.0
      %188 = vmatpush2.msra.mxu0 0.0
      %189 = vmatprep.subr.mxu0 0.0
      %190 = vmatpush2.msra.mxu0 0.0
      %191 = vmatprep.subr.mxu0 0.0
      %192 = vmatpush2.msra.mxu0 0.0
      %193 = vmatprep.subr.mxu0 0.0
      %194 = vmatpush2.msra.mxu0 0.0
      %195 = vmatprep.subr.mxu0 0.0
      %196 = vmatpush2.msra.mxu0 0.0
      %197 = vmatprep.subr.mxu0 0.0
      %198 = vmatpush2.msra.mxu0 0.0
      %199 = vmatprep.subr.mxu0 0.0
      %200 = vmatpush2.msra.mxu0 0.0
      %201 = vmatprep.subr.mxu0 0.0
      %202 = vmatpush2.msra.mxu0 0.0
      %203 = vmatprep.subr.mxu0 0.0
      %204 = vmatpush2.msra.mxu0 0.0
      %205 = vmatprep.subr.mxu0 0.0
      %206 = vmatpush2.msra.mxu0 0.0
      %207 = vmatprep.subr.mxu0 0.0
      %208 = vmatpush2.msra.mxu0 0.0
      %209 = vmatprep.mubr.f32.mxu0 0.0
      %210 = vmatmul.mubr.f32.gmra.mxu0 %v140
      %v211 = vpop.f32.mrf.mxu0
      %v212 = vadd.f32 %v137, %v211
      %v213 = vpop.f32.mrf.mxu0
      %214 = vmatprep.mubr.f32.mxu0 0.0
      %215 = vmatmul.mubr.f32.gmra.mxu0 %v143
      %v216 = vpop.f32.mrf.mxu0
      %v217 = vadd.f32 %v137, %v216
      %v218 = vpop.f32.mrf.mxu0
      %219 = vdwg.mxu0
      %v220 = vmax.f32 %v212, 0.0
      %v221 = vmax.f32 %v217, 0.0
      %222 = vst [vmem:[#allocation3] sm:$0xff] %v220
      %223 = vst [vmem:[#allocation3 + $0x8] sm:$0xff] %v221
    $region25: #{tpu_custom_call.1} parent=1 // pred_fallthru
      _
    // Predicated region
    $region26: #{tpu_custom_call.1} parent=1 // pred_check
      _
    $region27: #{tpu_custom_call.1} parent=1 // pred_check_branch
      %225 = sbr.rel (0) target = $region29
    $region28: #{tpu_custom_call.1} parent=1 // pred_region
      %s227 = ssub.s32 256, 256
      %228 = vsyncadd [#allocation4], %s227
      %s229 = sshll.u32 [#allocation3], 4
      %s230 = int_to_ptr.vmem [resolvable:$true] %s229
      %235 = dma.vmem_to_hbm [thread:$0]  %s230, 256, %s4, [#allocation4], 128, 128, 8
    $region29: #{tpu_custom_call.1} parent=1 // pred_fallthru
      _
    // Predicated region
    $region30: #{tpu_custom_call.1} parent=1 // pred_check
      _
    $region31: #{tpu_custom_call.1} parent=1 // pred_check_branch
      %237 = sbr.rel (0) target = $region33
    $region32: #{tpu_custom_call.1} parent=1 // pred_region
      %238 = dma.done [#allocation4], 256
    $region33: #{tpu_custom_call.1} parent=1 // pred_fallthru
      _
    %239 = vsyncpa [#allocation4], 1

</llo_original>
